<compile_context>
chip_gen: v7x
topology: tpu7x:2x2x1
jax: 0.10.0
libtpu: 0.0.40
codegen_flags: <defaults>
</compile_context>

<pallas_src>
import functools

import numpy as np
import jax
import jax.numpy as jnp
from jax.experimental import pallas as pl
from jax.experimental.pallas import tpu as pltpu

WINDOW_SIZE = 11
SIGMA = 1.5
C1 = 0.01 ** 2
C2 = 0.03 ** 2


# ----------------------------- host-side helpers -----------------------------
def gaussian_window(size=WINDOW_SIZE, sigma=SIGMA):
    x = np.arange(size, dtype=np.float64)
    g = np.exp(-((x - size // 2) ** 2) / (2.0 * sigma ** 2))
    return (g / g.sum()).astype(np.float32)


def blur_matrix(n, g):
    """n x n (symmetric) matrix B so B @ x is the zero-padded gaussian filtering
    of x along its leading axis (equivalent to F.conv2d with padding=win//2)."""
    size = g.shape[0]
    half = size // 2
    idx = np.arange(n)
    d = idx[None, :] - idx[:, None] + half
    valid = (d >= 0) & (d < size)
    return np.where(valid, g[np.clip(d, 0, size - 1)], 0.0).astype(np.float32)


def _replication_matrix(G, C):
    """(3*G*C, G*C) 0/1 matrix R; R @ t2d replicates each sample's C target rows
    once per prediction, matching the natural (sample, pred, chan) row order of
    the predictions.  A 0/1 matmul is exact in f32."""
    rows = np.arange(3 * G * C)
    g = rows // (3 * C)
    c = rows % C
    R = np.zeros((3 * G * C, G * C), np.float32)
    R[rows, g * C + c] = 1.0
    return R


def _tpu_limits():
    """Best-effort per-generation limits: (VMEM capacity bytes, TensorCores)."""
    vmem_cap = 64 << 20          # conservative default (v7x: 64 MiB per core)
    num_cores = 1
    try:
        get_info = getattr(pltpu, "get_tpu_info", None)
        if get_info is not None:
            info = get_info()
            cap = getattr(info, "vmem_capacity_bytes", None)
            if isinstance(cap, (int, np.integer)) and cap > 0:
                vmem_cap = int(cap)
            for name in ("num_cores", "num_tensorcores", "tensorcores_per_chip",
                         "cores_per_chip", "core_count"):
                v = getattr(info, name, None)
                if isinstance(v, (int, np.integer)) and v > 0:
                    num_cores = int(v)
                    break
    except Exception:
        pass
    return vmem_cap, num_cores


def _vmem_bytes_estimate(G, C, HW):
    """Everything resident per grid step: double-buffered input blocks, the
    constant operators, the scratch slab, and a generous temporaries allowance."""
    gc = G * C
    b = 4
    return (2 * (3 * gc * HW + gc * HW) * b    # out / tgt blocks (x2 pipeline bufs)
            + 2 * HW * HW * b                  # blur operator K (x2 pipeline bufs)
            + 2 * 3 * gc * gc * b              # replication matrix R
            + 11 * gc * HW * b                 # blur-input scratch slab
            + 32 * gc * HW * b                 # blurred + SSIM/MSE/TV temporaries
            + 2 * 128 * b)                     # partial-loss block


def _pick_group_size(batch_size, n_chan, hw, *, vmem_budget, prefer_steps=1):
    """Samples per grid step.  Hard: divides the batch, row count sublane
    aligned (G*C % 8 == 0, or the full batch).  Soft: fits the VMEM budget,
    yields >= prefer_steps grid steps (so every TensorCore has work on v7x),
    and is as large as possible (MXU row utilization, fewer per-step overheads;
    on v5e this also grows 11*G*C toward the 128-row MXU tile)."""
    cands = [g for g in range(1, batch_size + 1)
             if batch_size % g == 0 and ((g * n_chan) % 8 == 0 or g == batch_size)]
    fitting = [g for g in cands if _vmem_bytes_estimate(g, n_chan, hw) <= vmem_budget]
    pool = fitting if fitting else [min(cands)]
    return max(pool, key=lambda g: (batch_size // g >= prefer_steps, g))


# --------------------------------- kernel -------------------------------------
def _one2one_loss_kernel(out_ref, tgt_ref, k_ref, r_ref, loss_ref, stack_ref, *,
                         n_samples, n_chan, img_h, img_w):
    G, C, H, W = n_samples, n_chan, img_h, img_w
    hw = H * W
    gc = G * C
    inv_chw = 1.0 / float(C * hw)

    o2d = out_ref[...].astype(jnp.float32)        # (3*G*C, HW), rows = (g, pred, c)
    t2d = tgt_ref[...].astype(jnp.float32)        # (G*C, HW),   rows = (g, c)
    K = k_ref[...]                                # (HW, HW) separable-blur operator
    R = r_ref[...]                                # (3*G*C, G*C) 0/1 replication

    # Target rows replicated per prediction (exact 0/1 matmul).
    t3 = jnp.dot(R, t2d, preferred_element_type=jnp.float32)      # (3*G*C, HW)

    # ---- 3x MSE(pred_k, target), summed over this step's samples ----
    diff = o2d - t3
    mse_sum = jnp.sum(diff * diff) * inv_chw

    # ---- TVLoss: lane-dense shifted differences (VPU/XLU; no dense operator) ----
    wd = (out_ref[:, 1:hw] - out_ref[:, 0:hw - 1]).astype(jnp.float32)  # (3gc, hw-1)
    colw = jax.lax.broadcasted_iota(jnp.int32, wd.shape, 1)
    w_tv = jnp.sum(jnp.where(colw % W == W - 1, 0.0, wd * wd))          # mask row wrap
    hd = (out_ref[:, W:hw] - out_ref[:, 0:hw - W]).astype(jnp.float32)  # (3gc, hw-W)
    h_tv = jnp.sum(hd * hd)                       # every flattened h-diff is valid
    tv_sum = 1.0e-4 * (2.0 / 3.0) * (h_tv / float(C * (H - 1) * W)
                                     + w_tv / float(C * H * (W - 1)))

    # ---- SSIM: 11 blur slabs written straight into scratch, ONE MXU matmul ----
    stack_ref[0:gc, :] = t2d
    stack_ref[gc:2 * gc, :] = t2d * t2d
    stack_ref[2 * gc:5 * gc, :] = o2d
    stack_ref[5 * gc:8 * gc, :] = o2d * o2d
    stack_ref[8 * gc:11 * gc, :] = o2d * t3
    # TODO(synk): bf16-casting this matmul halves K's footprint but was flagged
    # as precision-sensitive (blur(x^2) - mu^2 cancellation); kept f32.
    blurred = jnp.dot(stack_ref[...], K, preferred_element_type=jnp.float32)

    mu2 = jnp.dot(R, blurred[0:gc], preferred_element_type=jnp.float32)      # blur(t)
    t2b = jnp.dot(R, blurred[gc:2 * gc], preferred_element_type=jnp.float32)  # blur(t^2)
    mu1 = blurred[2 * gc:5 * gc]                  # blur(pred)
    x2b = blurred[5 * gc:8 * gc]                  # blur(pred^2)
    xtb = blurred[8 * gc:11 * gc]                 # blur(pred*t)

    mu1_sq = mu1 * mu1
    mu2_sq = mu2 * mu2
    mu1_mu2 = mu1 * mu2
    sigma1_sq = x2b - mu1_sq
    sigma2_sq = t2b - mu2_sq
    sigma12 = xtb - mu1_mu2
    num = (2.0 * mu1_mu2 + C1) * (2.0 * sigma12 + C2)
    den = (mu1_sq + mu2_sq + C1) * (sigma1_sq + sigma2_sq + C2)
    ssim_map = num * pl.reciprocal(den, approx=True)          # EUP divide
    ssim_sum = jnp.sum(ssim_map) * inv_chw        # = sum_{g,k} mean(ssim_map_{g,k})

    contrib = mse_sum + tv_sum + (3.0 * G - ssim_sum)

    # Lane-dense (1,128) partial store; wrapper sums lane 0 across steps.
    loss_ref[...] = jnp.broadcast_to(contrib, loss_ref.shape).astype(loss_ref.dtype)


# -------------------------------- wrapper --------------------------------------
@functools.partial(jax.jit, static_argnames=("batch_size",))
def one2one_loss_ssim(output, target, batch_size, epoch=0):
    """output: (batch_size*3, C, H, W), target: (batch_size, C, H, W) [NCHW].
    `epoch` is accepted for parity with the PyTorch forward but unused."""
    del epoch
    _, C, H, W = output.shape
    HW = H * W

    vmem_cap, num_cores = _tpu_limits()
    G = _pick_group_size(batch_size, C, HW,
                         vmem_budget=vmem_cap // 2, prefer_steps=num_cores)
    num_steps = batch_size // G
    GC = G * C

    # Metadata-only reshapes (no extra HBM pass, no transpose): rows stay in
    # natural (sample, prediction, channel) order, lane dim = H*W.
    out_r = output.reshape(batch_size * 3 * C, HW)
    tgt_r = target.reshape(batch_size * C, HW)

    # Trace-time (numpy) constant operators.
    g = gaussian_window()
    BH = blur_matrix(H, g)
    BW = blur_matrix(W, g)
    K = jnp.asarray(np.kron(BH, BW))               # (HW, HW); x_flat @ K == blur(x)_flat
    R = jnp.asarray(_replication_matrix(G, C))     # (3*GC, GC)
    # TODO(synk): for larger H*W, tile K into (HW, col_tile) strips with an extra
    # grid axis (or exploit its ~window*W band structure) instead of the dense
    # Kronecker operator -- it stops fitting VMEM around ~40x40 images on v7x.

    kernel = functools.partial(_one2one_loss_kernel,
                               n_samples=G, n_chan=C, img_h=H, img_w=W)

    partial_losses = pl.pallas_call(
        kernel,
        out_shape=jax.ShapeDtypeStruct((num_steps, 1, 128), jnp.float32),
        grid=(num_steps,),
        in_specs=[
            pl.BlockSpec((3 * GC, HW), lambda i: (i, 0)),
            pl.BlockSpec((GC, HW), lambda i: (i, 0)),
            # Constant operands: constant index map => fetched once (re-DMA elided).
            # TODO(synk): single-buffer them (pl.Buffered(1)) to reclaim the
            # second pipeline buffer when H*W grows.
            pl.BlockSpec((HW, HW), lambda i: (0, 0)),
            pl.BlockSpec((3 * GC, GC), lambda i: (0, 0)),
        ],
        out_specs=pl.BlockSpec((1, 1, 128), lambda i: (i, 0, 0)),
        scratch_shapes=[pltpu.VMEM((11 * GC, HW), jnp.float32)],
        compiler_params=pltpu.CompilerParams(
            dimension_semantics=("parallel",),
            vmem_limit_bytes=int(max(32 << 20, min(vmem_cap * 3 // 4, 100 << 20))),
        ),
    )(out_r, tgt_r, K, R)

    return jnp.sum(partial_losses[:, 0, 0]) / batch_size


# ---------------------------- pure-JAX reference --------------------------------
def _ref_ssim(img1, img2, g):
    C = img1.shape[1]
    w2 = jnp.outer(g, g)[None, None]                       # (1,1,11,11)
    kern = jnp.tile(w2, (C, 1, 1, 1))                      # (C,1,11,11)
    pad = WINDOW_SIZE // 2

    def conv(x):
        return jax.lax.conv_general_dilated(
            x, kern, window_strides=(1, 1), padding=[(pad, pad), (pad, pad)],
            dimension_numbers=("NCHW", "OIHW", "NCHW"), feature_group_count=C,
            precision=jax.lax.Precision.HIGHEST)

    mu1, mu2 = conv(img1), conv(img2)
    mu1_sq, mu2_sq, mu1_mu2 = mu1 * mu1, mu2 * mu2, mu1 * mu2
    s1 = conv(img1 * img1) - mu1_sq
    s2 = conv(img2 * img2) - mu2_sq
    s12 = conv(img1 * img2) - mu1_mu2
    ssim_map = ((2 * mu1_mu2 + C1) * (2 * s12 + C2)) / (
        (mu1_sq + mu2_sq + C1) * (s1 + s2 + C2))
    return jnp.mean(ssim_map)


def _ref_loss(output, target, batch_size):
    g = jnp.asarray(gaussian_window())
    total = jnp.float32(0.0)
    for i in range(batch_size):
        o = output[3 * i:3 * i + 3].astype(jnp.float32)
        t = target[i].astype(jnp.float32)
        Cc, H, W = t.shape
        base = sum(jnp.mean((o[k] - t) ** 2) for k in range(3))
        h_tv = jnp.sum((o[:, :, 1:, :] - o[:, :, :-1, :]) ** 2)
        w_tv = jnp.sum((o[:, :, :, 1:] - o[:, :, :, :-1]) ** 2)
        base = base + 1e-4 * (2.0 * (h_tv / (Cc * (H - 1) * W)
                                     + w_tv / (Cc * H * (W - 1))) / 3.0)
        for k in range(3):
            base = base + (1.0 - _ref_ssim(o[k][None], t[None], g))
        total = total + base
    return total / batch_size


# ----------------------------------- main ----------------------------------------
if __name__ == "__main__":
    key = jax.random.PRNGKey(0)
    batch_size, C, H, W = 2, 4, 16, 16
    k1, k2 = jax.random.split(key)
    output = jax.random.normal(k1, (batch_size * 3, C, H, W), dtype=jnp.float32)
    target = jax.random.normal(k2, (batch_size, C, H, W), dtype=jnp.float32)

    got = jax.block_until_ready(one2one_loss_ssim(output, target, batch_size, epoch=0))
    want = jax.block_until_ready(_ref_loss(output, target, batch_size))
    np.testing.assert_allclose(np.asarray(got), np.asarray(want),
                               rtol=2e-3, atol=2e-3)
    print("KERNEL_OK")
</pallas_src>

<mosaic_0001>
module attributes {stable_mosaic.version = 11 : i64} {
  func.func @_one2one_loss_kernel(%arg0: i32, %arg1: memref<24x256xf32, #tpu.memory_space<vmem>>, %arg2: memref<8x256xf32, #tpu.memory_space<vmem>>, %arg3: memref<256x256xf32, #tpu.memory_space<vmem>>, %arg4: memref<24x8xf32, #tpu.memory_space<vmem>>, %arg5: memref<1x1x128xf32, #tpu.memory_space<vmem>>, %arg6: memref<88x256xf32, #tpu.memory_space<vmem>>) attributes {dimension_semantics = [#tpu.dimension_semantics<parallel>], iteration_bounds = array<i64: 1>, scalar_prefetch = 0 : i64, scratch_operands = 1 : i64, tpu.core_type = #tpu.core_type<tc>, window_params = [{transform_indices = @transform_0, window_bounds = array<i64: 24, 256>}, {transform_indices = @transform_1, window_bounds = array<i64: 8, 256>}, {pipeline_mode = #tpu.pipeline_mode<synchronous>, transform_indices = @transform_2, window_bounds = array<i64: 256, 256>}, {pipeline_mode = #tpu.pipeline_mode<synchronous>, transform_indices = @transform_3, window_bounds = array<i64: 24, 8>}, {transform_indices = @transform_4, window_bounds = array<i64: 1, 1, 128>}]} {
    %c0 = arith.constant 0 : index
    %c0_0 = arith.constant 0 : index
    %0 = vector.load %arg1[%c0, %c0_0] : memref<24x256xf32, #tpu.memory_space<vmem>>, vector<24x256xf32>
    %c0_1 = arith.constant 0 : index
    %c0_2 = arith.constant 0 : index
    %1 = vector.load %arg2[%c0_1, %c0_2] : memref<8x256xf32, #tpu.memory_space<vmem>>, vector<8x256xf32>
    %c0_3 = arith.constant 0 : index
    %c0_4 = arith.constant 0 : index
    %2 = vector.load %arg3[%c0_3, %c0_4] : memref<256x256xf32, #tpu.memory_space<vmem>>, vector<256x256xf32>
    %c0_5 = arith.constant 0 : index
    %c0_6 = arith.constant 0 : index
    %3 = vector.load %arg4[%c0_5, %c0_6] : memref<24x8xf32, #tpu.memory_space<vmem>>, vector<24x8xf32>
    %cst = arith.constant dense<0.000000e+00> : vector<24x256xf32>
    %4 = tpu.matmul %3, %1, %cst {dimension_numbers = #tpu.dot_dimension_numbers<[1], [0], [0], [1], [0, 0, 1, 1], [], []>} : vector<24x8xf32>, vector<8x256xf32>, vector<24x256xf32> -> vector<24x256xf32>
    %5 = arith.subf %0, %4 : vector<24x256xf32>
    %6 = arith.mulf %5, %5 : vector<24x256xf32>
    %7 = vector.shape_cast %6 : vector<24x256xf32> to vector<1x24x256xf32>
    %cst_7 = arith.constant dense<0.000000e+00> : vector<1xf32>
    %8 = vector.multi_reduction <add>, %7, %cst_7 [1, 2] : vector<1x24x256xf32> to vector<1xf32>
    %9 = vector.shape_cast %8 : vector<1xf32> to vector<1x1x1xf32>
    %10 = vector.extract %9[0, 0, 0] : f32 from vector<1x1x1xf32>
    %cst_8 = arith.constant 9.765625E-4 : f32
    %11 = arith.mulf %10, %cst_8 : f32
    %c0_9 = arith.constant 0 : index
    %c1 = arith.constant 1 : index
    %12 = vector.load %arg1[%c0_9, %c1] : memref<24x256xf32, #tpu.memory_space<vmem>>, vector<24x255xf32>
    %c0_10 = arith.constant 0 : index
    %c0_11 = arith.constant 0 : index
    %13 = vector.load %arg1[%c0_10, %c0_11] : memref<24x256xf32, #tpu.memory_space<vmem>>, vector<24x255xf32>
    %14 = arith.subf %12, %13 : vector<24x255xf32>
    %15 = tpu.iota {dimensions = array<i32: 1>} : vector<24x255xi32>
    %c16_i32 = arith.constant 16 : i32
    %c0_i32 = arith.constant 0 : i32
    %16 = arith.cmpi eq, %c16_i32, %c0_i32 : i32
    %c1_i32 = arith.constant 1 : i32
    %17 = arith.select %16, %c1_i32, %c16_i32 : i32
    %18 = vector.broadcast %17 : i32 to vector<24x255xi32>
    %19 = arith.remsi %15, %18 : vector<24x255xi32>
    %c0_i32_12 = arith.constant 0 : i32
    %20 = vector.broadcast %c0_i32_12 : i32 to vector<24x255xi32>
    %21 = arith.cmpi ne, %19, %20 : vector<24x255xi32>
    %c0_i32_13 = arith.constant 0 : i32
    %22 = vector.broadcast %c0_i32_13 : i32 to vector<24x255xi32>
    %23 = arith.cmpi slt, %19, %22 : vector<24x255xi32>
    %c0_i32_14 = arith.constant 0 : i32
    %24 = arith.cmpi slt, %17, %c0_i32_14 : i32
    %25 = vector.broadcast %24 : i1 to vector<24x255xi1>
    %26 = vector.broadcast %25 : vector<24x255xi1> to vector<24x255xi1>
    %27 = arith.xori %23, %26 : vector<24x255xi1>
    %28 = arith.andi %27, %21 : vector<24x255xi1>
    %29 = vector.broadcast %17 : i32 to vector<24x255xi32>
    %30 = arith.addi %19, %29 : vector<24x255xi32>
    %31 = arith.select %28, %30, %19 : vector<24x255xi1>, vector<24x255xi32>
    %c15_i32 = arith.constant 15 : i32
    %32 = vector.broadcast %c15_i32 : i32 to vector<24x255xi32>
    %33 = arith.cmpi eq, %31, %32 : vector<24x255xi32>
    %34 = arith.mulf %14, %14 : vector<24x255xf32>
    %cst_15 = arith.constant 0.000000e+00 : f32
    %35 = vector.broadcast %cst_15 : f32 to vector<24x255xf32>
    %36 = arith.select %33, %35, %34 : vector<24x255xi1>, vector<24x255xf32>
    %37 = vector.shape_cast %36 : vector<24x255xf32> to vector<1x24x255xf32>
    %cst_16 = arith.constant dense<0.000000e+00> : vector<1xf32>
    %38 = vector.multi_reduction <add>, %37, %cst_16 [1, 2] : vector<1x24x255xf32> to vector<1xf32>
    %39 = vector.shape_cast %38 : vector<1xf32> to vector<1x1x1xf32>
    %40 = vector.extract %39[0, 0, 0] : f32 from vector<1x1x1xf32>
    %c0_17 = arith.constant 0 : index
    %c16 = arith.constant 16 : index
    %41 = vector.load %arg1[%c0_17, %c16] : memref<24x256xf32, #tpu.memory_space<vmem>>, vector<24x240xf32>
    %c0_18 = arith.constant 0 : index
    %c0_19 = arith.constant 0 : index
    %42 = vector.load %arg1[%c0_18, %c0_19] : memref<24x256xf32, #tpu.memory_space<vmem>>, vector<24x240xf32>
    %43 = arith.subf %41, %42 : vector<24x240xf32>
    %44 = arith.mulf %43, %43 : vector<24x240xf32>
    %45 = vector.shape_cast %44 : vector<24x240xf32> to vector<1x24x240xf32>
    %cst_20 = arith.constant dense<0.000000e+00> : vector<1xf32>
    %46 = vector.multi_reduction <add>, %45, %cst_20 [1, 2] : vector<1x24x240xf32> to vector<1xf32>
    %47 = vector.shape_cast %46 : vector<1xf32> to vector<1x1x1xf32>
    %48 = vector.extract %47[0, 0, 0] : f32 from vector<1x1x1xf32>
    %cst_21 = arith.constant 9.600000e+02 : f32
    %49 = arith.divf %48, %cst_21 : f32
    %cst_22 = arith.constant 9.600000e+02 : f32
    %50 = arith.divf %40, %cst_22 : f32
    %51 = arith.addf %49, %50 : f32
    %cst_23 = arith.constant 6.66666674E-5 : f32
    %52 = arith.mulf %cst_23, %51 : f32
    %c0_24 = arith.constant 0 : index
    %c0_25 = arith.constant 0 : index
    %53 = vector.load %arg6[%c0_24, %c0_25] : memref<88x256xf32, #tpu.memory_space<vmem>>, vector<8x256xf32>
    tpu.vector_store %arg6[%c0_24, %c0_25], %1 {strides = array<i32>} : memref<88x256xf32, #tpu.memory_space<vmem>>, vector<8x256xf32>,
    %54 = arith.mulf %1, %1 : vector<8x256xf32>
    %c8 = arith.constant 8 : index
    %c0_26 = arith.constant 0 : index
    %55 = vector.load %arg6[%c8, %c0_26] : memref<88x256xf32, #tpu.memory_space<vmem>>, vector<8x256xf32>
    tpu.vector_store %arg6[%c8, %c0_26], %54 {strides = array<i32>} : memref<88x256xf32, #tpu.memory_space<vmem>>, vector<8x256xf32>,
    %c16_27 = arith.constant 16 : index
    %c0_28 = arith.constant 0 : index
    %56 = vector.load %arg6[%c16_27, %c0_28] : memref<88x256xf32, #tpu.memory_space<vmem>>, vector<24x256xf32>
    tpu.vector_store %arg6[%c16_27, %c0_28], %0 {strides = array<i32>} : memref<88x256xf32, #tpu.memory_space<vmem>>, vector<24x256xf32>,
    %57 = arith.mulf %0, %0 : vector<24x256xf32>
    %c40 = arith.constant 40 : index
    %c0_29 = arith.constant 0 : index
    %58 = vector.load %arg6[%c40, %c0_29] : memref<88x256xf32, #tpu.memory_space<vmem>>, vector<24x256xf32>
    tpu.vector_store %arg6[%c40, %c0_29], %57 {strides = array<i32>} : memref<88x256xf32, #tpu.memory_space<vmem>>, vector<24x256xf32>,
    %59 = arith.mulf %0, %4 : vector<24x256xf32>
    %c64 = arith.constant 64 : index
    %c0_30 = arith.constant 0 : index
    %60 = vector.load %arg6[%c64, %c0_30] : memref<88x256xf32, #tpu.memory_space<vmem>>, vector<24x256xf32>
    tpu.vector_store %arg6[%c64, %c0_30], %59 {strides = array<i32>} : memref<88x256xf32, #tpu.memory_space<vmem>>, vector<24x256xf32>,
    %c0_31 = arith.constant 0 : index
    %c0_32 = arith.constant 0 : index
    %61 = vector.load %arg6[%c0_31, %c0_32] : memref<88x256xf32, #tpu.memory_space<vmem>>, vector<88x256xf32>
    %cst_33 = arith.constant dense<0.000000e+00> : vector<88x256xf32>
    %62 = tpu.matmul %61, %2, %cst_33 {dimension_numbers = #tpu.dot_dimension_numbers<[1], [0], [0], [1], [0, 0, 1, 1], [], []>} : vector<88x256xf32>, vector<256x256xf32>, vector<88x256xf32> -> vector<88x256xf32>
    %63 = vector.extract_strided_slice %62 {offsets = [0, 0], sizes = [8, 256], strides = [1, 1]} : vector<88x256xf32> to vector<8x256xf32>
    %cst_34 = arith.constant dense<0.000000e+00> : vector<24x256xf32>
    %64 = tpu.matmul %3, %63, %cst_34 {dimension_numbers = #tpu.dot_dimension_numbers<[1], [0], [0], [1], [0, 0, 1, 1], [], []>} : vector<24x8xf32>, vector<8x256xf32>, vector<24x256xf32> -> vector<24x256xf32>
    %65 = vector.extract_strided_slice %62 {offsets = [8, 0], sizes = [8, 256], strides = [1, 1]} : vector<88x256xf32> to vector<8x256xf32>
    %cst_35 = arith.constant dense<0.000000e+00> : vector<24x256xf32>
    %66 = tpu.matmul %3, %65, %cst_35 {dimension_numbers = #tpu.dot_dimension_numbers<[1], [0], [0], [1], [0, 0, 1, 1], [], []>} : vector<24x8xf32>, vector<8x256xf32>, vector<24x256xf32> -> vector<24x256xf32>
    %67 = vector.extract_strided_slice %62 {offsets = [16, 0], sizes = [24, 256], strides = [1, 1]} : vector<88x256xf32> to vector<24x256xf32>
    %68 = vector.extract_strided_slice %62 {offsets = [40, 0], sizes = [24, 256], strides = [1, 1]} : vector<88x256xf32> to vector<24x256xf32>
    %69 = vector.extract_strided_slice %62 {offsets = [64, 0], sizes = [24, 256], strides = [1, 1]} : vector<88x256xf32> to vector<24x256xf32>
    %70 = arith.mulf %67, %67 : vector<24x256xf32>
    %71 = arith.mulf %64, %64 : vector<24x256xf32>
    %72 = arith.mulf %67, %64 : vector<24x256xf32>
    %73 = arith.subf %68, %70 : vector<24x256xf32>
    %74 = arith.subf %66, %71 : vector<24x256xf32>
    %75 = arith.subf %69, %72 : vector<24x256xf32>
    %cst_36 = arith.constant 2.000000e+00 : f32
    %76 = vector.broadcast %cst_36 : f32 to vector<24x256xf32>
    %77 = arith.mulf %76, %72 : vector<24x256xf32>
    %cst_37 = arith.constant 9.99999974E-5 : f32
    %78 = vector.broadcast %cst_37 : f32 to vector<24x256xf32>
    %79 = arith.addf %77, %78 : vector<24x256xf32>
    %cst_38 = arith.constant 2.000000e+00 : f32
    %80 = vector.broadcast %cst_38 : f32 to vector<24x256xf32>
    %81 = arith.mulf %80, %75 : vector<24x256xf32>
    %cst_39 = arith.constant 8.99999984E-4 : f32
    %82 = vector.broadcast %cst_39 : f32 to vector<24x256xf32>
    %83 = arith.addf %81, %82 : vector<24x256xf32>
    %84 = arith.mulf %79, %83 : vector<24x256xf32>
    %85 = arith.addf %70, %71 : vector<24x256xf32>
    %cst_40 = arith.constant 9.99999974E-5 : f32
    %86 = vector.broadcast %cst_40 : f32 to vector<24x256xf32>
    %87 = arith.addf %85, %86 : vector<24x256xf32>
    %88 = arith.addf %73, %74 : vector<24x256xf32>
    %cst_41 = arith.constant 8.99999984E-4 : f32
    %89 = vector.broadcast %cst_41 : f32 to vector<24x256xf32>
    %90 = arith.addf %88, %89 : vector<24x256xf32>
    %91 = arith.mulf %87, %90 : vector<24x256xf32>
    %92 = tpu.reciprocal %91 {approx = true} : vector<24x256xf32> -> vector<24x256xf32>
    %93 = arith.mulf %84, %92 : vector<24x256xf32>
    %94 = vector.shape_cast %93 : vector<24x256xf32> to vector<1x24x256xf32>
    %cst_42 = arith.constant dense<0.000000e+00> : vector<1xf32>
    %95 = vector.multi_reduction <add>, %94, %cst_42 [1, 2] : vector<1x24x256xf32> to vector<1xf32>
    %96 = vector.shape_cast %95 : vector<1xf32> to vector<1x1x1xf32>
    %97 = vector.extract %96[0, 0, 0] : f32 from vector<1x1x1xf32>
    %cst_43 = arith.constant 9.765625E-4 : f32
    %98 = arith.mulf %97, %cst_43 : f32
    %99 = arith.addf %11, %52 : f32
    %cst_44 = arith.constant 6.000000e+00 : f32
    %100 = arith.subf %cst_44, %98 : f32
    %101 = arith.addf %99, %100 : f32
    %102 = vector.broadcast %101 : f32 to vector<1x1x128xf32>
    %c0_45 = arith.constant 0 : index
    %c0_46 = arith.constant 0 : index
    %c0_47 = arith.constant 0 : index
    %103 = vector.load %arg5[%c0_45, %c0_46, %c0_47] : memref<1x1x128xf32, #tpu.memory_space<vmem>>, vector<1x1x128xf32>
    tpu.vector_store %arg5[%c0_45, %c0_46, %c0_47], %102 {strides = array<i32>} : memref<1x1x128xf32, #tpu.memory_space<vmem>>, vector<1x1x128xf32>,
    return
  }
  func.func @transform_0(%arg0: i32) -> (i32, i32) {
    %c0_i32 = arith.constant 0 : i32
    %c0_i32_0 = arith.constant 0 : i32
    return %arg0, %c0_i32 : i32, i32
  }
  func.func @transform_1(%arg0: i32) -> (i32, i32) {
    %c0_i32 = arith.constant 0 : i32
    %c0_i32_0 = arith.constant 0 : i32
    return %arg0, %c0_i32 : i32, i32
  }
  func.func @transform_2(%arg0: i32) -> (i32, i32) {
    %c0_i32 = arith.constant 0 : i32
    %c0_i32_0 = arith.constant 0 : i32
    %c0_i32_1 = arith.constant 0 : i32
    return %c0_i32, %c0_i32_0 : i32, i32
  }
  func.func @transform_3(%arg0: i32) -> (i32, i32) {
    %c0_i32 = arith.constant 0 : i32
    %c0_i32_0 = arith.constant 0 : i32
    %c0_i32_1 = arith.constant 0 : i32
    return %c0_i32, %c0_i32_0 : i32, i32
  }
  func.func @transform_4(%arg0: i32) -> (i32, i32, i32) {
    %c0_i32 = arith.constant 0 : i32
    %c0_i32_0 = arith.constant 0 : i32
    %c0_i32_1 = arith.constant 0 : i32
    return %arg0, %c0_i32, %c0_i32_0 : i32, i32, i32
  }
}

</mosaic_0001>

<llo_original>
// kernel: one2one_loss_ssim.1
$region0: #{one2one_loss_ssim.1}
  #allocation0 [shape = 'u32[]', space=smem, size = 0x4, offset = 0x4, fixed_abs, tag = 'smem constant byte address 0x4 - core index']
  #allocation1 [shape = 'u32[144,128]{1,0:T(1,128)}', space=vmem, size = 0x12000, scoped, tag = 'internal scratch']
  #allocation2 [shape = 'f32[88,256]{1,0:T(8,128)}', space=vmem, size = 0x16000, scoped, tag = 'scratch operand']
  %s0 = inlined_call_operand.vmem [shape: f32[24,256], index: 0, kind: input, shape index: {}]
  %s1 = inlined_call_operand.vmem [shape: f32[8,256], index: 1, kind: input, shape index: {}]
  %s2 = inlined_call_operand.vmem [shape: f32[256,256], index: 2, kind: input, shape index: {}]
  %s3 = inlined_call_operand.vmem [shape: f32[24,8], index: 3, kind: input, shape index: {}]
  %s4 = inlined_call_operand.vmem [shape: f32[1,1,128], index: 4, kind: output, shape index: {}]
  %s5 = sld [smem:[#allocation0]]
  $region26: #{one2one_loss_ssim.1} parent=0
    _
  %s7 = ssub.s32 1, %s5
  %s8 = scalar_select 0, %s7, %s5
  // Predicated region
  $region2: #{one2one_loss_ssim.1} parent=0 // pred_check
    _
  $region3: #{one2one_loss_ssim.1} parent=0 // pred_check_branch
    %10 = sbr.rel (0) target = $region5
  $region4: #{one2one_loss_ssim.1} parent=0 // pred_region
    _
  $region5: #{one2one_loss_ssim.1} parent=0 // pred_fallthru
    _
  // Predicated region
  $region6: #{one2one_loss_ssim.1} parent=0 // pred_check
    _
  $region7: #{one2one_loss_ssim.1} parent=0 // pred_check_branch
    %12 = sbr.rel (0) target = $region9
  $region8: #{one2one_loss_ssim.1} parent=0 // pred_region
    _
  $region9: #{one2one_loss_ssim.1} parent=0 // pred_fallthru
    _
  // Predicated region
  $region10: #{one2one_loss_ssim.1} parent=0 // pred_check
    _
  $region11: #{one2one_loss_ssim.1} parent=0 // pred_check_branch
    %14 = sbr.rel (0) target = $region13
  $region12: #{one2one_loss_ssim.1} parent=0 // pred_region
    _
  $region13: #{one2one_loss_ssim.1} parent=0 // pred_fallthru
    _
  // Predicated region
  $region14: #{one2one_loss_ssim.1} parent=0 // pred_check
    _
  $region15: #{one2one_loss_ssim.1} parent=0 // pred_check_branch
    %16 = sbr.rel (0) target = $region17
  $region16: #{one2one_loss_ssim.1} parent=0 // pred_region
    _
  $region17: #{one2one_loss_ssim.1} parent=0 // pred_fallthru
    _
  %v17 = vld [vmem:[%s0] sm:$0xff]
  %v18 = vld [vmem:[%s0 + $0x8] sm:$0xff]
  %v19 = vld [vmem:[%s0 + $0x10] sm:$0xff]
  %v20 = vld [vmem:[%s0 + $0x18] sm:$0xff]
  %v21 = vld [vmem:[%s0 + $0x20] sm:$0xff]
  %v22 = vld [vmem:[%s0 + $0x28] sm:$0xff]
  %v23 = vld [vmem:[%s1] sm:$0xff]
  %v24 = vld [vmem:[%s1 + $0x8] sm:$0xff]
  %v25 = vld [vmem:[%s2] sm:$0xff]
  %v26 = vld [vmem:[%s2 + $0x8] sm:$0xff]
  %v27 = vld [vmem:[%s2 + $0x10] sm:$0xff]
  %v28 = vld [vmem:[%s2 + $0x18] sm:$0xff]
  %v29 = vld [vmem:[%s2 + $0x20] sm:$0xff]
  %v30 = vld [vmem:[%s2 + $0x28] sm:$0xff]
  %v31 = vld [vmem:[%s2 + $0x30] sm:$0xff]
  %v32 = vld [vmem:[%s2 + $0x38] sm:$0xff]
  %v33 = vld [vmem:[%s2 + $0x40] sm:$0xff]
  %v34 = vld [vmem:[%s2 + $0x48] sm:$0xff]
  %v35 = vld [vmem:[%s2 + $0x50] sm:$0xff]
  %v36 = vld [vmem:[%s2 + $0x58] sm:$0xff]
  %v37 = vld [vmem:[%s2 + $0x60] sm:$0xff]
  %v38 = vld [vmem:[%s2 + $0x68] sm:$0xff]
  %v39 = vld [vmem:[%s2 + $0x70] sm:$0xff]
  %v40 = vld [vmem:[%s2 + $0x78] sm:$0xff]
  %v41 = vld [vmem:[%s2 + $0x80] sm:$0xff]
  %v42 = vld [vmem:[%s2 + $0x88] sm:$0xff]
  %v43 = vld [vmem:[%s2 + $0x90] sm:$0xff]
  %v44 = vld [vmem:[%s2 + $0x98] sm:$0xff]
  %v45 = vld [vmem:[%s2 + $0xa0] sm:$0xff]
  %v46 = vld [vmem:[%s2 + $0xa8] sm:$0xff]
  %v47 = vld [vmem:[%s2 + $0xb0] sm:$0xff]
  %v48 = vld [vmem:[%s2 + $0xb8] sm:$0xff]
  %v49 = vld [vmem:[%s2 + $0xc0] sm:$0xff]
  %v50 = vld [vmem:[%s2 + $0xc8] sm:$0xff]
  %v51 = vld [vmem:[%s2 + $0xd0] sm:$0xff]
  %v52 = vld [vmem:[%s2 + $0xd8] sm:$0xff]
  %v53 = vld [vmem:[%s2 + $0xe0] sm:$0xff]
  %v54 = vld [vmem:[%s2 + $0xe8] sm:$0xff]
  %v55 = vld [vmem:[%s2 + $0xf0] sm:$0xff]
  %v56 = vld [vmem:[%s2 + $0xf8] sm:$0xff]
  %v57 = vld [vmem:[%s2 + $0x100] sm:$0xff]
  %v58 = vld [vmem:[%s2 + $0x108] sm:$0xff]
  %v59 = vld [vmem:[%s2 + $0x110] sm:$0xff]
  %v60 = vld [vmem:[%s2 + $0x118] sm:$0xff]
  %v61 = vld [vmem:[%s2 + $0x120] sm:$0xff]
  %v62 = vld [vmem:[%s2 + $0x128] sm:$0xff]
  %v63 = vld [vmem:[%s2 + $0x130] sm:$0xff]
  %v64 = vld [vmem:[%s2 + $0x138] sm:$0xff]
  %v65 = vld [vmem:[%s2 + $0x140] sm:$0xff]
  %v66 = vld [vmem:[%s2 + $0x148] sm:$0xff]
  %v67 = vld [vmem:[%s2 + $0x150] sm:$0xff]
  %v68 = vld [vmem:[%s2 + $0x158] sm:$0xff]
  %v69 = vld [vmem:[%s2 + $0x160] sm:$0xff]
  %v70 = vld [vmem:[%s2 + $0x168] sm:$0xff]
  %v71 = vld [vmem:[%s2 + $0x170] sm:$0xff]
  %v72 = vld [vmem:[%s2 + $0x178] sm:$0xff]
  %v73 = vld [vmem:[%s2 + $0x180] sm:$0xff]
  %v74 = vld [vmem:[%s2 + $0x188] sm:$0xff]
  %v75 = vld [vmem:[%s2 + $0x190] sm:$0xff]
  %v76 = vld [vmem:[%s2 + $0x198] sm:$0xff]
  %v77 = vld [vmem:[%s2 + $0x1a0] sm:$0xff]
  %v78 = vld [vmem:[%s2 + $0x1a8] sm:$0xff]
  %v79 = vld [vmem:[%s2 + $0x1b0] sm:$0xff]
  %v80 = vld [vmem:[%s2 + $0x1b8] sm:$0xff]
  %v81 = vld [vmem:[%s2 + $0x1c0] sm:$0xff]
  %v82 = vld [vmem:[%s2 + $0x1c8] sm:$0xff]
  %v83 = vld [vmem:[%s2 + $0x1d0] sm:$0xff]
  %v84 = vld [vmem:[%s2 + $0x1d8] sm:$0xff]
  %v85 = vld [vmem:[%s2 + $0x1e0] sm:$0xff]
  %v86 = vld [vmem:[%s2 + $0x1e8] sm:$0xff]
  %v87 = vld [vmem:[%s2 + $0x1f0] sm:$0xff]
  %v88 = vld [vmem:[%s2 + $0x1f8] sm:$0xff]
  %v89 = vld [vmem:[%s3] sm:$0xff]
  %v90 = vld [vmem:[%s3 + $0x8] sm:$0xff]
  %v91 = vld [vmem:[%s3 + $0x10] sm:$0xff]
  %vm92 = vcmask 64512
  %v94 = vsel %vm92, %v89, 0
  %v97 = vsel %vm92, %v90, 0
  %v100 = vsel %vm92, %v91, 0
  %102 = vmatprep.subr.mxu0 %v24
  %103 = vmatpush1.msra.mxu0 %v23
  %104 = vmatprep.subr.mxu0 0.0
  %105 = vmatpush1.msra.mxu0 0.0
  %106 = vmatprep.subr.mxu0 0.0
  %107 = vmatpush1.msra.mxu0 0.0
  %108 = vmatprep.subr.mxu0 0.0
  %109 = vmatpush1.msra.mxu0 0.0
  %110 = vmatprep.subr.mxu0 0.0
  %111 = vmatpush1.msra.mxu0 0.0
  %112 = vmatprep.subr.mxu0 0.0
  %113 = vmatpush1.msra.mxu0 0.0
  %114 = vmatprep.subr.mxu0 0.0
  %115 = vmatpush1.msra.mxu0 0.0
  %116 = vmatprep.subr.mxu0 0.0
  %117 = vmatpush1.msra.mxu0 0.0
  %118 = vmatprep.subr.mxu0 0.0
  %119 = vmatpush1.msra.mxu0 0.0
  %120 = vmatprep.subr.mxu0 0.0
  %121 = vmatpush1.msra.mxu0 0.0
  %122 = vmatprep.subr.mxu0 0.0
  %123 = vmatpush1.msra.mxu0 0.0
  %124 = vmatprep.subr.mxu0 0.0
  %125 = vmatpush1.msra.mxu0 0.0
  %126 = vmatprep.subr.mxu0 0.0
  %127 = vmatpush1.msra.mxu0 0.0
  %128 = vmatprep.subr.mxu0 0.0
  %129 = vmatpush1.msra.mxu0 0.0
  %130 = vmatprep.subr.mxu0 0.0
  %131 = vmatpush1.msra.mxu0 0.0
  %132 = vmatprep.subr.mxu0 0.0
  %133 = vmatpush1.msra.mxu0 0.0
  %134 = vmatprep.subr.mxu0 0.0
  %135 = vmatpush1.msra.mxu0 0.0
  %136 = vmatprep.subr.mxu0 0.0
  %137 = vmatpush1.msra.mxu0 0.0
  %138 = vmatprep.subr.mxu0 0.0
  %139 = vmatpush1.msra.mxu0 0.0
  %140 = vmatprep.subr.mxu0 0.0
  %141 = vmatpush1.msra.mxu0 0.0
  %142 = vmatprep.subr.mxu0 0.0
  %143 = vmatpush1.msra.mxu0 0.0
  %144 = vmatprep.subr.mxu0 0.0
  %145 = vmatpush1.msra.mxu0 0.0
  %146 = vmatprep.subr.mxu0 0.0
  %147 = vmatpush1.msra.mxu0 0.0
  %148 = vmatprep.subr.mxu0 0.0
  %149 = vmatpush1.msra.mxu0 0.0
  %150 = vmatprep.subr.mxu0 0.0
  %151 = vmatpush1.msra.mxu0 0.0
  %152 = vmatprep.subr.mxu0 0.0
  %153 = vmatpush1.msra.mxu0 0.0
  %154 = vmatprep.subr.mxu0 0.0
  %155 = vmatpush1.msra.mxu0 0.0
  %156 = vmatprep.subr.mxu0 0.0
  %157 = vmatpush1.msra.mxu0 0.0
  %158 = vmatprep.subr.mxu0 0.0
  %159 = vmatpush1.msra.mxu0 0.0
  %160 = vmatprep.subr.mxu0 0.0
  %161 = vmatpush1.msra.mxu0 0.0
  %162 = vmatprep.subr.mxu0 0.0
  %163 = vmatpush1.msra.mxu0 0.0
  %164 = vmatprep.subr.mxu0 0.0
  %165 = vmatpush1.msra.mxu0 0.0
  %166 = vmatprep.mubr.f32.mxu0 0.0
  %167 = vmatmul.mubr.f32.gmra.mrb[0].mxu0 %v94
  %v168 = vpop.f32.mrb[0].mxu0
  %v169 = vadd.f32 0.0, %v168
  %v170 = vpop.f32.mrb[0].mxu0
  %v171 = vadd.f32 0.0, %v170
  %172 = vmatprep.mubr.f32.mxu0 0.0
  %173 = vmatmul.mubr.f32.gmra.mrb[0].mxu0 %v97
  %v174 = vpop.f32.mrb[0].mxu0
  %v175 = vadd.f32 0.0, %v174
  %v176 = vpop.f32.mrb[0].mxu0
  %v177 = vadd.f32 0.0, %v176
  %178 = vmatprep.mubr.f32.mxu0 0.0
  %179 = vmatmul.mubr.f32.gmra.mrb[0].mxu0 %v100
  %v180 = vpop.f32.mrb[0].mxu0
  %v181 = vadd.f32 0.0, %v180
  %v182 = vpop.f32.mrb[0].mxu0
  %v183 = vadd.f32 0.0, %v182
  %184 = vdwg.mxu0
  %v185 = vsub.f32 %v17, %v169
  %v186 = vsub.f32 %v18, %v171
  %v187 = vsub.f32 %v19, %v175
  %v188 = vsub.f32 %v20, %v177
  %v189 = vsub.f32 %v21, %v181
  %v190 = vsub.f32 %v22, %v183
  %v191 = vmul.f32 %v185, %v185
  %v192 = vmul.f32 %v186, %v186
  %v193 = vmul.f32 %v187, %v187
  %v194 = vmul.f32 %v188, %v188
  %v195 = vmul.f32 %v189, %v189
  %v196 = vmul.f32 %v190, %v190
  %v197 = vadd.f32 %v191, %v192
  %v198 = vadd.f32 %v197, %v193
  %v199 = vadd.f32 %v198, %v194
  %v200 = vadd.f32 %v199, %v195
  %v201 = vadd.f32 %v200, %v196
  %202 = vadd.xlane.f32.xlu0 %v201
  %v203 = vpop.xlane.xlu0 %202
  %v204 = vrot.slane %v203, 4
  %v205 = vadd.f32 %v203, %v204
  %v206 = vrot.slane %v205, 2
  %v207 = vadd.f32 %v205, %v206
  %v208 = vrot.slane %v207, 1
  %v209 = vadd.f32 %v207, %v208
  %s210 = vtos %v209
  %s211 = smul.f32 %s210, 0.0009765625
  %218 = vrot.lane.b32.xlu0 %v17, 1
  %v219 = vpop.permute.xlu0 %218
  %220 = vrot.lane.b32.xlu0 %v18, 1
  %v221 = vpop.permute.xlu0 %220
  %222 = vrot.lane.b32.xlu0 %v19, 1
  %v223 = vpop.permute.xlu0 %222
  %224 = vrot.lane.b32.xlu0 %v20, 1
  %v225 = vpop.permute.xlu0 %224
  %226 = vrot.lane.b32.xlu0 %v21, 1
  %v227 = vpop.permute.xlu0 %226
  %228 = vrot.lane.b32.xlu0 %v22, 1
  %v229 = vpop.permute.xlu0 %228
  %vm230 = vcmask 7168
  %v231 = vsel %vm230, %v219, %v221
  %v232 = vsel %vm230, %v223, %v225
  %v233 = vsel %vm230, %v227, %v229
  %v240 = vsub.f32 %v17, %v219
  %v241 = vsub.f32 %v18, %v231
  %v242 = vsub.f32 %v19, %v223
  %v243 = vsub.f32 %v20, %v232
  %v244 = vsub.f32 %v21, %v227
  %v245 = vsub.f32 %v22, %v233
  %v246 = vlaneseq
  %v247 = vand.u32 %v246, 127
  %v248 = vadd.s32 %v247, 128
  %vm249 = vcmp.lt.s32.totalorder %v247, 0
  %v250 = vsub.s32 0, %v247
  %v251 = vsel %vm249, %v250, %v247
  %v252 = vshrl.u32 %v251, 4
  %v253 = vand.u32 %v251, 15
  %v254 = vsub.s32 0, %v253
  %v255 = vsel %vm249, %v254, %v253
  %vm256 = vcmp.lt.s32.totalorder %v248, 0
  %v257 = vsub.s32 0, %v248
  %v258 = vsel %vm256, %v257, %v248
  %v259 = vshrl.u32 %v258, 4
  %v260 = vand.u32 %v258, 15
  %v261 = vsub.s32 0, %v260
  %v262 = vsel %vm256, %v261, %v260
  %vm263 = vcmp.ne.s32.totalorder %v255, 0
  %vm264 = vcmp.ne.s32.totalorder %v262, 0
  %vm265 = vcmp.lt.s32.totalorder %v255, 0
  %vm266 = vcmp.lt.s32.totalorder %v262, 0
  %vm267 = vmand %vm265, %vm263
  %vm268 = vmand %vm266, %vm264
  %v269 = vadd.s32 %v255, 16
  %v270 = vadd.s32 %v262, 16
  %v271 = vsel %vm267, %v269, %v255
  %v272 = vsel %vm268, %v270, %v262
  %vm273 = vcmp.eq.s32.totalorder %v271, 15
  %vm274 = vcmp.eq.s32.totalorder %v272, 15
  %v275 = vmul.f32 %v240, %v240
  %v276 = vmul.f32 %v241, %v241
  %v277 = vmul.f32 %v242, %v242
  %v278 = vmul.f32 %v243, %v243
  %v279 = vmul.f32 %v244, %v244
  %v280 = vmul.f32 %v245, %v245
  %287 = vrot.lane.b32.xlu0 %v275, 127
  %v288 = vpop.permute.xlu0 %287
  %289 = vrot.lane.b32.xlu0 %v276, 127
  %v290 = vpop.permute.xlu0 %289
  %291 = vrot.lane.b32.xlu0 %v277, 127
  %v292 = vpop.permute.xlu0 %291
  %293 = vrot.lane.b32.xlu0 %v278, 127
  %v294 = vpop.permute.xlu0 %293
  %295 = vrot.lane.b32.xlu0 %v279, 127
  %v296 = vpop.permute.xlu0 %295
  %297 = vrot.lane.b32.xlu0 %v280, 127
  %v298 = vpop.permute.xlu0 %297
  %vm299 = vcmask 1039360
  %v300 = vsel %vm299, %v288, %v290
  %v301 = vsel %vm299, %v292, %v294
  %v302 = vsel %vm299, %v296, %v298
  %v309 = vsel %vm273, 0.0, %v300
  %v310 = vsel %vm274, 0.0, %v290
  %v311 = vsel %vm273, 0.0, %v301
  %v312 = vsel %vm274, 0.0, %v294
  %v313 = vsel %vm273, 0.0, %v302
  %v314 = vsel %vm274, 0.0, %v298
  %v315 = vsel %vm299, %v310, 0.0
  %v316 = vadd.f32 %v309, %v315
  %v317 = vadd.f32 %v316, %v311
  %v318 = vsel %vm299, %v312, 0.0
  %v319 = vadd.f32 %v317, %v318
  %v320 = vadd.f32 %v319, %v313
  %v321 = vsel %vm299, %v314, 0.0
  %v322 = vadd.f32 %v320, %v321
  %323 = vadd.xlane.f32.xlu0 %v322
  %v324 = vpop.xlane.xlu0 %323
  %v325 = vrot.slane %v324, 4
  %v326 = vadd.f32 %v324, %v325
  %v327 = vrot.slane %v326, 2
  %v328 = vadd.f32 %v326, %v327
  %v329 = vrot.slane %v328, 1
  %v330 = vadd.f32 %v328, %v329
  %s331 = vtos %v330
  %332 = vrot.lane.b32.xlu0 %v17, 16
  %v333 = vpop.permute.xlu0 %332
  %334 = vrot.lane.b32.xlu0 %v18, 16
  %v335 = vpop.permute.xlu0 %334
  %336 = vrot.lane.b32.xlu0 %v19, 16
  %v337 = vpop.permute.xlu0 %336
  %338 = vrot.lane.b32.xlu0 %v20, 16
  %v339 = vpop.permute.xlu0 %338
  %340 = vrot.lane.b32.xlu0 %v21, 16
  %v341 = vpop.permute.xlu0 %340
  %342 = vrot.lane.b32.xlu0 %v22, 16
  %v343 = vpop.permute.xlu0 %342
  %vm344 = vcmask 130048
  %v345 = vsel %vm344, %v333, %v335
  %v346 = vsel %vm344, %v337, %v339
  %v347 = vsel %vm344, %v341, %v343
  %v354 = vsub.f32 %v17, %v333
  %v355 = vsub.f32 %v18, %v345
  %v356 = vsub.f32 %v19, %v337
  %v357 = vsub.f32 %v20, %v346
  %v358 = vsub.f32 %v21, %v341
  %v359 = vsub.f32 %v22, %v347
  %v360 = vmul.f32 %v354, %v354
  %v361 = vmul.f32 %v355, %v355
  %v362 = vmul.f32 %v356, %v356
  %v363 = vmul.f32 %v357, %v357
  %v364 = vmul.f32 %v358, %v358
  %v365 = vmul.f32 %v359, %v359
  %372 = vrot.lane.b32.xlu0 %v360, 112
  %v373 = vpop.permute.xlu0 %372
  %374 = vrot.lane.b32.xlu0 %v361, 112
  %v375 = vpop.permute.xlu0 %374
  %376 = vrot.lane.b32.xlu0 %v362, 112
  %v377 = vpop.permute.xlu0 %376
  %378 = vrot.lane.b32.xlu0 %v363, 112
  %v379 = vpop.permute.xlu0 %378
  %380 = vrot.lane.b32.xlu0 %v364, 112
  %v381 = vpop.permute.xlu0 %380
  %382 = vrot.lane.b32.xlu0 %v365, 112
  %v383 = vpop.permute.xlu0 %382
  %vm384 = vcmask 916480
  %v385 = vsel %vm384, %v373, %v375
  %v386 = vsel %vm384, %v377, %v379
  %v387 = vsel %vm384, %v381, %v383
  %v394 = vsel %vm384, %v375, 0.0
  %v395 = vadd.f32 %v385, %v394
  %v396 = vadd.f32 %v395, %v386
  %v397 = vsel %vm384, %v379, 0.0
  %v398 = vadd.f32 %v396, %v397
  %v399 = vadd.f32 %v398, %v387
  %v400 = vsel %vm384, %v383, 0.0
  %v401 = vadd.f32 %v399, %v400
  %402 = vadd.xlane.f32.xlu0 %v401
  %v403 = vpop.xlane.xlu0 %402
  %v404 = vrot.slane %v403, 4
  %v405 = vadd.f32 %v403, %v404
  %v406 = vrot.slane %v405, 2
  %v407 = vadd.f32 %v405, %v406
  %v408 = vrot.slane %v407, 1
  %v409 = vadd.f32 %v407, %v408
  %s410 = vtos %v409
  %v411 = vrcp.pop 960.0
  %s412 = vtos %v411
  %s413 = smul.f32 %s410, %s412
  %v414 = vrcp.pop 960.0
  %s415 = vtos %v414
  %s416 = smul.f32 %s331, %s415
  %s417 = sadd.f32 %s413, %s416
  %s418 = smul.f32 %s417, 6.666667e-05
  %419 = vst [vmem:[#allocation2] sm:$0xff] %v23
  %420 = vst [vmem:[#allocation2 + $0x8] sm:$0xff] %v24
  %v421 = vmul.f32 %v23, %v23
  %v422 = vmul.f32 %v24, %v24
  %423 = vst [vmem:[#allocation2 + $0x10] sm:$0xff] %v421
  %424 = vst [vmem:[#allocation2 + $0x18] sm:$0xff] %v422
  %425 = vst [vmem:[#allocation2 + $0x20] sm:$0xff] %v17
  %426 = vst [vmem:[#allocation2 + $0x28] sm:$0xff] %v18
  %427 = vst [vmem:[#allocation2 + $0x30] sm:$0xff] %v19
  %428 = vst [vmem:[#allocation2 + $0x38] sm:$0xff] %v20
  %429 = vst [vmem:[#allocation2 + $0x40] sm:$0xff] %v21
  %430 = vst [vmem:[#allocation2 + $0x48] sm:$0xff] %v22
  %v431 = vmul.f32 %v17, %v17
  %v432 = vmul.f32 %v18, %v18
  %v433 = vmul.f32 %v19, %v19
  %v434 = vmul.f32 %v20, %v20
  %v435 = vmul.f32 %v21, %v21
  %v436 = vmul.f32 %v22, %v22
  %437 = vst [vmem:[#allocation2 + $0x50] sm:$0xff] %v431
  %438 = vst [vmem:[#allocation2 + $0x58] sm:$0xff] %v432
  %439 = vst [vmem:[#allocation2 + $0x60] sm:$0xff] %v433
  %440 = vst [vmem:[#allocation2 + $0x68] sm:$0xff] %v434
  %441 = vst [vmem:[#allocation2 + $0x70] sm:$0xff] %v435
  %442 = vst [vmem:[#allocation2 + $0x78] sm:$0xff] %v436
  %v443 = vmul.f32 %v17, %v169
  %v444 = vmul.f32 %v18, %v171
  %v445 = vmul.f32 %v19, %v175
  %v446 = vmul.f32 %v20, %v177
  %v447 = vmul.f32 %v21, %v181
  %v448 = vmul.f32 %v22, %v183
  %449 = vst [vmem:[#allocation2 + $0x80] sm:$0xff] %v443
  %450 = vst [vmem:[#allocation2 + $0x88] sm:$0xff] %v444
  %451 = vst [vmem:[#allocation2 + $0x90] sm:$0xff] %v445
  %452 = vst [vmem:[#allocation2 + $0x98] sm:$0xff] %v446
  %453 = vst [vmem:[#allocation2 + $0xa0] sm:$0xff] %v447
  %454 = vst [vmem:[#allocation2 + $0xa8] sm:$0xff] %v448
  %v455 = vld [vmem:[#allocation2] sm:$0xff]
  %v456 = vld [vmem:[#allocation2 + $0x8] sm:$0xff]
  %v457 = vld [vmem:[#allocation2 + $0x10] sm:$0xff]
  %v458 = vld [vmem:[#allocation2 + $0x18] sm:$0xff]
  %v459 = vld [vmem:[#allocation2 + $0x20] sm:$0xff]
  %v460 = vld [vmem:[#allocation2 + $0x28] sm:$0xff]
  %v461 = vld [vmem:[#allocation2 + $0x30] sm:$0xff]
  %v462 = vld [vmem:[#allocation2 + $0x38] sm:$0xff]
  %v463 = vld [vmem:[#allocation2 + $0x40] sm:$0xff]
  %v464 = vld [vmem:[#allocation2 + $0x48] sm:$0xff]
  %v465 = vld [vmem:[#allocation2 + $0x50] sm:$0xff]
  %v466 = vld [vmem:[#allocation2 + $0x58] sm:$0xff]
  %v467 = vld [vmem:[#allocation2 + $0x60] sm:$0xff]
  %v468 = vld [vmem:[#allocation2 + $0x68] sm:$0xff]
  %v469 = vld [vmem:[#allocation2 + $0x70] sm:$0xff]
  %v470 = vld [vmem:[#allocation2 + $0x78] sm:$0xff]
  %v471 = vld [vmem:[#allocation2 + $0x80] sm:$0xff]
  %v472 = vld [vmem:[#allocation2 + $0x88] sm:$0xff]
  %v473 = vld [vmem:[#allocation2 + $0x90] sm:$0xff]
  %v474 = vld [vmem:[#allocation2 + $0x98] sm:$0xff]
  %v475 = vld [vmem:[#allocation2 + $0xa0] sm:$0xff]
  %v476 = vld [vmem:[#allocation2 + $0xa8] sm:$0xff]
  %477 = vmatprep.subr.mxu0 %v26
  %478 = vmatpush1.msra.mxu0 %v25
  %479 = vmatprep.subr.mxu0 %v28
  %480 = vmatpush1.msra.mxu0 %v27
  %481 = vmatprep.subr.mxu0 %v30
  %482 = vmatpush1.msra.mxu0 %v29
  %483 = vmatprep.subr.mxu0 %v32
  %484 = vmatpush1.msra.mxu0 %v31
  %485 = vmatprep.subr.mxu0 %v34
  %486 = vmatpush1.msra.mxu0 %v33
  %487 = vmatprep.subr.mxu0 %v36
  %488 = vmatpush1.msra.mxu0 %v35
  %489 = vmatprep.subr.mxu0 %v38
  %490 = vmatpush1.msra.mxu0 %v37
  %491 = vmatprep.subr.mxu0 %v40
  %492 = vmatpush1.msra.mxu0 %v39
  %493 = vmatprep.subr.mxu0 %v42
  %494 = vmatpush1.msra.mxu0 %v41
  %495 = vmatprep.subr.mxu0 %v44
  %496 = vmatpush1.msra.mxu0 %v43
  %497 = vmatprep.subr.mxu0 %v46
  %498 = vmatpush1.msra.mxu0 %v45
  %499 = vmatprep.subr.mxu0 %v48
  %500 = vmatpush1.msra.mxu0 %v47
  %501 = vmatprep.subr.mxu0 %v50
  %502 = vmatpush1.msra.mxu0 %v49
  %503 = vmatprep.subr.mxu0 %v52
  %504 = vmatpush1.msra.mxu0 %v51
  %505 = vmatprep.subr.mxu0 %v54
  %506 = vmatpush1.msra.mxu0 %v53
  %507 = vmatprep.subr.mxu0 %v56
  %508 = vmatpush1.msra.mxu0 %v55
  %509 = vmatprep.subr.mxu0 %v58
  %510 = vmatpush1.msra.mxu0 %v57
  %511 = vmatprep.subr.mxu0 %v60
  %512 = vmatpush1.msra.mxu0 %v59
  %513 = vmatprep.subr.mxu0 %v62
  %514 = vmatpush1.msra.mxu0 %v61
  %515 = vmatprep.subr.mxu0 %v64
  %516 = vmatpush1.msra.mxu0 %v63
  %517 = vmatprep.subr.mxu0 %v66
  %518 = vmatpush1.msra.mxu0 %v65
  %519 = vmatprep.subr.mxu0 %v68
  %520 = vmatpush1.msra.mxu0 %v67
  %521 = vmatprep.subr.mxu0 %v70
  %522 = vmatpush1.msra.mxu0 %v69
  %523 = vmatprep.subr.mxu0 %v72
  %524 = vmatpush1.msra.mxu0 %v71
  %525 = vmatprep.subr.mxu0 %v74
  %526 = vmatpush1.msra.mxu0 %v73
  %527 = vmatprep.subr.mxu0 %v76
  %528 = vmatpush1.msra.mxu0 %v75
  %529 = vmatprep.subr.mxu0 %v78
  %530 = vmatpush1.msra.mxu0 %v77
  %531 = vmatprep.subr.mxu0 %v80
  %532 = vmatpush1.msra.mxu0 %v79
  %533 = vmatprep.subr.mxu0 %v82
  %534 = vmatpush1.msra.mxu0 %v81
  %535 = vmatprep.subr.mxu0 %v84
  %536 = vmatpush1.msra.mxu0 %v83
  %537 = vmatprep.subr.mxu0 %v86
  %538 = vmatpush1.msra.mxu0 %v85
  %539 = vmatprep.subr.mxu0 %v88
  %540 = vmatpush1.msra.mxu0 %v87
  %541 = vmatprep.mubr.f32.mxu0 %v456
  %542 = vmatmul.mubr.f32.gmra.mrb[0].mxu0 %v455
  %v543 = vpop.f32.mrb[0].mxu0
  %v544 = vadd.f32 0.0, %v543
  %v545 = vpop.f32.mrb[0].mxu0
  %v546 = vadd.f32 0.0, %v545
  %547 = vmatprep.mubr.f32.mxu0 %v458
  %548 = vmatmul.mubr.f32.gmra.mrb[0].mxu0 %v457
  %v549 = vpop.f32.mrb[0].mxu0
  %v550 = vadd.f32 0.0, %v549
  %v551 = vpop.f32.mrb[0].mxu0
  %v552 = vadd.f32 0.0, %v551
  %553 = vmatprep.mubr.f32.mxu0 %v460
  %554 = vmatmul.mubr.f32.gmra.mrb[0].mxu0 %v459
  %v555 = vpop.f32.mrb[0].mxu0
  %v556 = vadd.f32 0.0, %v555
  %v557 = vpop.f32.mrb[0].mxu0
  %v558 = vadd.f32 0.0, %v557
  %559 = vmatprep.mubr.f32.mxu0 %v462
  %560 = vmatmul.mubr.f32.gmra.mrb[0].mxu0 %v461
  %v561 = vpop.f32.mrb[0].mxu0
  %v562 = vadd.f32 0.0, %v561
  %v563 = vpop.f32.mrb[0].mxu0
  %v564 = vadd.f32 0.0, %v563
  %565 = vmatprep.mubr.f32.mxu0 %v464
  %566 = vmatmul.mubr.f32.gmra.mrb[0].mxu0 %v463
  %v567 = vpop.f32.mrb[0].mxu0
  %v568 = vadd.f32 0.0, %v567
  %v569 = vpop.f32.mrb[0].mxu0
  %v570 = vadd.f32 0.0, %v569
  %571 = vmatprep.mubr.f32.mxu0 %v466
  %572 = vmatmul.mubr.f32.gmra.mrb[0].mxu0 %v465
  %v573 = vpop.f32.mrb[0].mxu0
  %v574 = vadd.f32 0.0, %v573
  %v575 = vpop.f32.mrb[0].mxu0
  %v576 = vadd.f32 0.0, %v575
  %577 = vmatprep.mubr.f32.mxu0 %v468
  %578 = vmatmul.mubr.f32.gmra.mrb[0].mxu0 %v467
  %v579 = vpop.f32.mrb[0].mxu0
  %v580 = vadd.f32 0.0, %v579
  %v581 = vpop.f32.mrb[0].mxu0
  %v582 = vadd.f32 0.0, %v581
  %583 = vmatprep.mubr.f32.mxu0 %v470
  %584 = vmatmul.mubr.f32.gmra.mrb[0].mxu0 %v469
  %v585 = vpop.f32.mrb[0].mxu0
  %v586 = vadd.f32 0.0, %v585
  %v587 = vpop.f32.mrb[0].mxu0
  %v588 = vadd.f32 0.0, %v587
  %589 = vmatprep.mubr.f32.mxu0 %v472
  %590 = vmatmul.mubr.f32.gmra.mrb[0].mxu0 %v471
  %v591 = vpop.f32.mrb[0].mxu0
  %v592 = vadd.f32 0.0, %v591
  %v593 = vpop.f32.mrb[0].mxu0
  %v594 = vadd.f32 0.0, %v593
  %595 = vmatprep.mubr.f32.mxu0 %v474
  %596 = vmatmul.mubr.f32.gmra.mrb[0].mxu0 %v473
  %v597 = vpop.f32.mrb[0].mxu0
  %v598 = vadd.f32 0.0, %v597
  %v599 = vpop.f32.mrb[0].mxu0
  %v600 = vadd.f32 0.0, %v599
  %601 = vmatprep.mubr.f32.mxu0 %v476
  %602 = vmatmul.mubr.f32.gmra.mrb[0].mxu0 %v475
  %v603 = vpop.f32.mrb[0].mxu0
  %v604 = vadd.f32 0.0, %v603
  %v605 = vpop.f32.mrb[0].mxu0
  %v606 = vadd.f32 0.0, %v605
  %607 = vdwg.mxu0
  %608 = vmatprep.subr.mxu0 %v546
  %609 = vmatpush1.msra.mxu0 %v544
  %610 = vmatprep.subr.mxu0 0.0
  %611 = vmatpush1.msra.mxu0 0.0
  %612 = vmatprep.subr.mxu0 0.0
  %613 = vmatpush1.msra.mxu0 0.0
  %614 = vmatprep.subr.mxu0 0.0
  %615 = vmatpush1.msra.mxu0 0.0
  %616 = vmatprep.subr.mxu0 0.0
  %617 = vmatpush1.msra.mxu0 0.0
  %618 = vmatprep.subr.mxu0 0.0
  %619 = vmatpush1.msra.mxu0 0.0
  %620 = vmatprep.subr.mxu0 0.0
  %621 = vmatpush1.msra.mxu0 0.0
  %622 = vmatprep.subr.mxu0 0.0
  %623 = vmatpush1.msra.mxu0 0.0
  %624 = vmatprep.subr.mxu0 0.0
  %625 = vmatpush1.msra.mxu0 0.0
  %626 = vmatprep.subr.mxu0 0.0
  %627 = vmatpush1.msra.mxu0 0.0
  %628 = vmatprep.subr.mxu0 0.0
  %629 = vmatpush1.msra.mxu0 0.0
  %630 = vmatprep.subr.mxu0 0.0
  %631 = vmatpush1.msra.mxu0 0.0
  %632 = vmatprep.subr.mxu0 0.0
  %633 = vmatpush1.msra.mxu0 0.0
  %634 = vmatprep.subr.mxu0 0.0
  %635 = vmatpush1.msra.mxu0 0.0
  %636 = vmatprep.subr.mxu0 0.0
  %637 = vmatpush1.msra.mxu0 0.0
  %638 = vmatprep.subr.mxu0 0.0
  %639 = vmatpush1.msra.mxu0 0.0
  %640 = vmatprep.subr.mxu0 0.0
  %641 = vmatpush1.msra.mxu0 0.0
  %642 = vmatprep.subr.mxu0 0.0
  %643 = vmatpush1.msra.mxu0 0.0
  %644 = vmatprep.subr.mxu0 0.0
  %645 = vmatpush1.msra.mxu0 0.0
  %646 = vmatprep.subr.mxu0 0.0
  %647 = vmatpush1.msra.mxu0 0.0
  %648 = vmatprep.subr.mxu0 0.0
  %649 = vmatpush1.msra.mxu0 0.0
  %650 = vmatprep.subr.mxu0 0.0
  %651 = vmatpush1.msra.mxu0 0.0
  %652 = vmatprep.subr.mxu0 0.0
  %653 = vmatpush1.msra.mxu0 0.0
  %654 = vmatprep.subr.mxu0 0.0
  %655 = vmatpush1.msra.mxu0 0.0
  %656 = vmatprep.subr.mxu0 0.0
  %657 = vmatpush1.msra.mxu0 0.0
  %658 = vmatprep.subr.mxu0 0.0
  %659 = vmatpush1.msra.mxu0 0.0
  %660 = vmatprep.subr.mxu0 0.0
  %661 = vmatpush1.msra.mxu0 0.0
  %662 = vmatprep.subr.mxu0 0.0
  %663 = vmatpush1.msra.mxu0 0.0
  %664 = vmatprep.subr.mxu0 0.0
  %665 = vmatpush1.msra.mxu0 0.0
  %666 = vmatprep.subr.mxu0 0.0
  %667 = vmatpush1.msra.mxu0 0.0
  %668 = vmatprep.subr.mxu0 0.0
  %669 = vmatpush1.msra.mxu0 0.0
  %670 = vmatprep.subr.mxu0 0.0
  %671 = vmatpush1.msra.mxu0 0.0
  %672 = vmatprep.mubr.f32.mxu0 0.0
  %673 = vmatmul.mubr.f32.gmra.mrb[0].mxu0 %v94
  %v674 = vpop.f32.mrb[0].mxu0
  %v675 = vadd.f32 0.0, %v674
  %v676 = vpop.f32.mrb[0].mxu0
  %v677 = vadd.f32 0.0, %v676
  %678 = vmatprep.mubr.f32.mxu0 0.0
  %679 = vmatmul.mubr.f32.gmra.mrb[0].mxu0 %v97
  %v680 = vpop.f32.mrb[0].mxu0
  %v681 = vadd.f32 0.0, %v680
  %v682 = vpop.f32.mrb[0].mxu0
  %v683 = vadd.f32 0.0, %v682
  %684 = vmatprep.mubr.f32.mxu0 0.0
  %685 = vmatmul.mubr.f32.gmra.mrb[0].mxu0 %v100
  %v686 = vpop.f32.mrb[0].mxu0
  %v687 = vadd.f32 0.0, %v686
  %v688 = vpop.f32.mrb[0].mxu0
  %v689 = vadd.f32 0.0, %v688
  %690 = vdwg.mxu0
  %691 = vmatprep.subr.mxu0 %v552
  %692 = vmatpush1.msra.mxu0 %v550
  %693 = vmatprep.subr.mxu0 0.0
  %694 = vmatpush1.msra.mxu0 0.0
  %695 = vmatprep.subr.mxu0 0.0
  %696 = vmatpush1.msra.mxu0 0.0
  %697 = vmatprep.subr.mxu0 0.0
  %698 = vmatpush1.msra.mxu0 0.0
  %699 = vmatprep.subr.mxu0 0.0
  %700 = vmatpush1.msra.mxu0 0.0
  %701 = vmatprep.subr.mxu0 0.0
  %702 = vmatpush1.msra.mxu0 0.0
  %703 = vmatprep.subr.mxu0 0.0
  %704 = vmatpush1.msra.mxu0 0.0
  %705 = vmatprep.subr.mxu0 0.0
  %706 = vmatpush1.msra.mxu0 0.0
  %707 = vmatprep.subr.mxu0 0.0
  %708 = vmatpush1.msra.mxu0 0.0
  %709 = vmatprep.subr.mxu0 0.0
  %710 = vmatpush1.msra.mxu0 0.0
  %711 = vmatprep.subr.mxu0 0.0
  %712 = vmatpush1.msra.mxu0 0.0
  %713 = vmatprep.subr.mxu0 0.0
  %714 = vmatpush1.msra.mxu0 0.0
  %715 = vmatprep.subr.mxu0 0.0
  %716 = vmatpush1.msra.mxu0 0.0
  %717 = vmatprep.subr.mxu0 0.0
  %718 = vmatpush1.msra.mxu0 0.0
  %719 = vmatprep.subr.mxu0 0.0
  %720 = vmatpush1.msra.mxu0 0.0
  %721 = vmatprep.subr.mxu0 0.0
  %722 = vmatpush1.msra.mxu0 0.0
  %723 = vmatprep.subr.mxu0 0.0
  %724 = vmatpush1.msra.mxu0 0.0
  %725 = vmatprep.subr.mxu0 0.0
  %726 = vmatpush1.msra.mxu0 0.0
  %727 = vmatprep.subr.mxu0 0.0
  %728 = vmatpush1.msra.mxu0 0.0
  %729 = vmatprep.subr.mxu0 0.0
  %730 = vmatpush1.msra.mxu0 0.0
  %731 = vmatprep.subr.mxu0 0.0
  %732 = vmatpush1.msra.mxu0 0.0
  %733 = vmatprep.subr.mxu0 0.0
  %734 = vmatpush1.msra.mxu0 0.0
  %735 = vmatprep.subr.mxu0 0.0
  %736 = vmatpush1.msra.mxu0 0.0
  %737 = vmatprep.subr.mxu0 0.0
  %738 = vmatpush1.msra.mxu0 0.0
  %739 = vmatprep.subr.mxu0 0.0
  %740 = vmatpush1.msra.mxu0 0.0
  %741 = vmatprep.subr.mxu0 0.0
  %742 = vmatpush1.msra.mxu0 0.0
  %743 = vmatprep.subr.mxu0 0.0
  %744 = vmatpush1.msra.mxu0 0.0
  %745 = vmatprep.subr.mxu0 0.0
  %746 = vmatpush1.msra.mxu0 0.0
  %747 = vmatprep.subr.mxu0 0.0
  %748 = vmatpush1.msra.mxu0 0.0
  %749 = vmatprep.subr.mxu0 0.0
  %750 = vmatpush1.msra.mxu0 0.0
  %751 = vmatprep.subr.mxu0 0.0
  %752 = vmatpush1.msra.mxu0 0.0
  %753 = vmatprep.subr.mxu0 0.0
  %754 = vmatpush1.msra.mxu0 0.0
  %755 = vmatprep.mubr.f32.mxu0 0.0
  %756 = vmatmul.mubr.f32.gmra.mrb[0].mxu0 %v94
  %v757 = vpop.f32.mrb[0].mxu0
  %v758 = vadd.f32 0.0, %v757
  %v759 = vpop.f32.mrb[0].mxu0
  %v760 = vadd.f32 0.0, %v759
  %761 = vmatprep.mubr.f32.mxu0 0.0
  %762 = vmatmul.mubr.f32.gmra.mrb[0].mxu0 %v97
  %v763 = vpop.f32.mrb[0].mxu0
  %v764 = vadd.f32 0.0, %v763
  %v765 = vpop.f32.mrb[0].mxu0
  %v766 = vadd.f32 0.0, %v765
  %767 = vmatprep.mubr.f32.mxu0 0.0
  %768 = vmatmul.mubr.f32.gmra.mrb[0].mxu0 %v100
  %v769 = vpop.f32.mrb[0].mxu0
  %v770 = vadd.f32 0.0, %v769
  %v771 = vpop.f32.mrb[0].mxu0
  %v772 = vadd.f32 0.0, %v771
  %773 = vdwg.mxu0
  %v774 = vmul.f32 %v556, %v556
  %v775 = vmul.f32 %v558, %v558
  %v776 = vmul.f32 %v562, %v562
  %v777 = vmul.f32 %v564, %v564
  %v778 = vmul.f32 %v568, %v568
  %v779 = vmul.f32 %v570, %v570
  %v780 = vmul.f32 %v675, %v675
  %v781 = vmul.f32 %v677, %v677
  %v782 = vmul.f32 %v681, %v681
  %v783 = vmul.f32 %v683, %v683
  %v784 = vmul.f32 %v687, %v687
  %v785 = vmul.f32 %v689, %v689
  %v786 = vmul.f32 %v556, %v675
  %v787 = vmul.f32 %v558, %v677
  %v788 = vmul.f32 %v562, %v681
  %v789 = vmul.f32 %v564, %v683
  %v790 = vmul.f32 %v568, %v687
  %v791 = vmul.f32 %v570, %v689
  %v792 = vsub.f32 %v574, %v774
  %v793 = vsub.f32 %v576, %v775
  %v794 = vsub.f32 %v580, %v776
  %v795 = vsub.f32 %v582, %v777
  %v796 = vsub.f32 %v586, %v778
  %v797 = vsub.f32 %v588, %v779
  %v798 = vsub.f32 %v758, %v780
  %v799 = vsub.f32 %v760, %v781
  %v800 = vsub.f32 %v764, %v782
  %v801 = vsub.f32 %v766, %v783
  %v802 = vsub.f32 %v770, %v784
  %v803 = vsub.f32 %v772, %v785
  %v804 = vsub.f32 %v592, %v786
  %v805 = vsub.f32 %v594, %v787
  %v806 = vsub.f32 %v598, %v788
  %v807 = vsub.f32 %v600, %v789
  %v808 = vsub.f32 %v604, %v790
  %v809 = vsub.f32 %v606, %v791
  %v810 = vmul.f32 %v786, 2.0
  %v811 = vmul.f32 %v787, 2.0
  %v812 = vmul.f32 %v788, 2.0
  %v813 = vmul.f32 %v789, 2.0
  %v814 = vmul.f32 %v790, 2.0
  %v815 = vmul.f32 %v791, 2.0
  %v816 = vadd.f32 %v810, 0.0001
  %v817 = vadd.f32 %v811, 0.0001
  %v818 = vadd.f32 %v812, 0.0001
  %v819 = vadd.f32 %v813, 0.0001
  %v820 = vadd.f32 %v814, 0.0001
  %v821 = vadd.f32 %v815, 0.0001
  %v822 = vmul.f32 %v804, 2.0
  %v823 = vmul.f32 %v805, 2.0
  %v824 = vmul.f32 %v806, 2.0
  %v825 = vmul.f32 %v807, 2.0
  %v826 = vmul.f32 %v808, 2.0
  %v827 = vmul.f32 %v809, 2.0
  %v828 = vadd.f32 %v822, 0.0009
  %v829 = vadd.f32 %v823, 0.0009
  %v830 = vadd.f32 %v824, 0.0009
  %v831 = vadd.f32 %v825, 0.0009
  %v832 = vadd.f32 %v826, 0.0009
  %v833 = vadd.f32 %v827, 0.0009
  %v834 = vmul.f32 %v816, %v828
  %v835 = vmul.f32 %v817, %v829
  %v836 = vmul.f32 %v818, %v830
  %v837 = vmul.f32 %v819, %v831
  %v838 = vmul.f32 %v820, %v832
  %v839 = vmul.f32 %v821, %v833
  %v840 = vadd.f32 %v774, %v780
  %v841 = vadd.f32 %v775, %v781
  %v842 = vadd.f32 %v776, %v782
  %v843 = vadd.f32 %v777, %v783
  %v844 = vadd.f32 %v778, %v784
  %v845 = vadd.f32 %v779, %v785
  %v846 = vadd.f32 %v840, 0.0001
  %v847 = vadd.f32 %v841, 0.0001
  %v848 = vadd.f32 %v842, 0.0001
  %v849 = vadd.f32 %v843, 0.0001
  %v850 = vadd.f32 %v844, 0.0001
  %v851 = vadd.f32 %v845, 0.0001
  %v852 = vadd.f32 %v792, %v798
  %v853 = vadd.f32 %v793, %v799
  %v854 = vadd.f32 %v794, %v800
  %v855 = vadd.f32 %v795, %v801
  %v856 = vadd.f32 %v796, %v802
  %v857 = vadd.f32 %v797, %v803
  %v858 = vadd.f32 %v852, 0.0009
  %v859 = vadd.f32 %v853, 0.0009
  %v860 = vadd.f32 %v854, 0.0009
  %v861 = vadd.f32 %v855, 0.0009
  %v862 = vadd.f32 %v856, 0.0009
  %v863 = vadd.f32 %v857, 0.0009
  %v864 = vmul.f32 %v846, %v858
  %v865 = vmul.f32 %v847, %v859
  %v866 = vmul.f32 %v848, %v860
  %v867 = vmul.f32 %v849, %v861
  %v868 = vmul.f32 %v850, %v862
  %v869 = vmul.f32 %v851, %v863
  %v870 = vrcp.pop %v864
  %v871 = vrcp.pop %v865
  %v872 = vrcp.pop %v866
  %v873 = vrcp.pop %v867
  %v874 = vrcp.pop %v868
  %v875 = vrcp.pop %v869
  %v876 = vmul.f32 %v834, %v870
  %v877 = vmul.f32 %v835, %v871
  %v878 = vmul.f32 %v836, %v872
  %v879 = vmul.f32 %v837, %v873
  %v880 = vmul.f32 %v838, %v874
  %v881 = vmul.f32 %v839, %v875
  %v882 = vadd.f32 %v876, %v877
  %v883 = vadd.f32 %v882, %v878
  %v884 = vadd.f32 %v883, %v879
  %v885 = vadd.f32 %v884, %v880
  %v886 = vadd.f32 %v885, %v881
  %887 = vadd.xlane.f32.xlu0 %v886
  %v888 = vpop.xlane.xlu0 %887
  %v889 = vrot.slane %v888, 4
  %v890 = vadd.f32 %v888, %v889
  %v891 = vrot.slane %v890, 2
  %v892 = vadd.f32 %v890, %v891
  %v893 = vrot.slane %v892, 1
  %v894 = vadd.f32 %v892, %v893
  %s895 = vtos %v894
  %s896 = smul.f32 %s895, 0.0009765625
  %s897 = sadd.f32 %s211, %s418
  %s898 = ssub.f32 6.0, %s896
  %s899 = sadd.f32 %s897, %s898
  %v900 = vstv %s899
  %901 = vst [vmem:[%s4] sm:$0x1] %v900
  // Predicated region
  $region18: #{one2one_loss_ssim.1} parent=0 // pred_check
    _
  $region19: #{one2one_loss_ssim.1} parent=0 // pred_check_branch
    %903 = sbr.rel (0) target = $region21
  $region20: #{one2one_loss_ssim.1} parent=0 // pred_region
    _
  $region21: #{one2one_loss_ssim.1} parent=0 // pred_fallthru
    _
  // Predicated region
  $region22: #{one2one_loss_ssim.1} parent=0 // pred_check
    _
  $region23: #{one2one_loss_ssim.1} parent=0 // pred_check_branch
    %905 = sbr.rel (0) target = $region25
  $region24: #{one2one_loss_ssim.1} parent=0 // pred_region
    _
  $region25: #{one2one_loss_ssim.1} parent=0 // pred_fallthru
    _

</llo_original>
